<compile_context>
chip_gen: v6e
topology: v6e:2x2x1
jax: 0.10.0
libtpu: 0.0.40
codegen_flags: <defaults>
</compile_context>

<pallas_src>
import jax
import jax.numpy as jnp
from jax.experimental import pallas as pl
from jax.experimental.pallas import tpu as pltpu


# ----------------------------- Pallas kernels -----------------------------

def _convt_stats_kernel(x_ref, w_ref, stats_ref):
    # x_ref:     (1, Cin, TP)       one batch item, one pixel tile (lanes = pixels)
    # w_ref:     (4*Cout, Cin)      stacked conv-transpose taps
    # stats_ref: (1, 1, 4*Cout, 2)  per-tile [sum, sum_of_squares] per (tap, channel)
    y = jnp.dot(w_ref[...], x_ref[0], preferred_element_type=jnp.float32)   # (4*Cout, TP)
    s = jnp.sum(y, axis=-1, keepdims=True)                                   # (4*Cout, 1)
    ss = jnp.sum(y * y, axis=-1, keepdims=True)                              # (4*Cout, 1)
    stats_ref[0, 0] = jnp.concatenate([s, ss], axis=1)                       # (4*Cout, 2)


def _convt_norm_act_kernel(x_ref, w_ref, scale_ref, shift_ref, o_ref):
    # x_ref:     (1, Cin, TP)
    # w_ref:     (4*Cout, Cin)
    # scale_ref: (1, 4*Cout, 1)   per-(n, channel) 1/sqrt(var+eps), tiled over the 4 taps
    # shift_ref: (1, 4*Cout, 1)   per-(n, channel) -mean/sqrt(var+eps), tiled over the 4 taps
    # o_ref:     (1, 4*Cout, TP)  lane-dense normalized+activated output tile
    y = jnp.dot(w_ref[...], x_ref[0], preferred_element_type=jnp.float32)   # (4*Cout, TP)
    z = y * scale_ref[0] + shift_ref[0]                                      # InstanceNorm
    o_ref[0] = jnp.where(z >= 0.0, z, 0.2 * z)                               # LeakyReLU(0.2)


# ----------------------------- wrappers -----------------------------

def _pick_tile(hw):
    # Largest lane-aligned tile that divides H*W; keeps (inputs+outputs) * double-buffer
    # comfortably inside the scoped VMEM default even at large channel counts.
    for tp in (1024, 512, 256, 128):
        if hw % tp == 0:
            return tp
    return hw  # small / odd spatial sizes: single full-width tile


def convt_stats(x3d, w_stack, tp):
    n, cin, hw = x3d.shape
    fc = w_stack.shape[0]
    nb = hw // tp
    return pl.pallas_call(
        _convt_stats_kernel,
        out_shape=jax.ShapeDtypeStruct((nb, n, fc, 2), jnp.float32),
        grid_spec=pltpu.PrefetchScalarGridSpec(
            num_scalar_prefetch=0,
            grid=(n, nb),
            in_specs=[pl.BlockSpec((1, cin, tp), lambda i, b: (i, 0, b)),
                      pl.BlockSpec((fc, cin), lambda i, b: (0, 0))],
            out_specs=pl.BlockSpec((1, 1, fc, 2), lambda i, b: (b, i, 0, 0)),
        ),
        compiler_params=pltpu.CompilerParams(
            dimension_semantics=("parallel", "parallel")),
    )(x3d, w_stack)


def convt_norm_act(x3d, w_stack, scale_t, shift_t, tp):
    n, cin, hw = x3d.shape
    fc = w_stack.shape[0]
    nb = hw // tp
    return pl.pallas_call(
        _convt_norm_act_kernel,
        out_shape=jax.ShapeDtypeStruct((n, fc, hw), jnp.float32),
        grid_spec=pltpu.PrefetchScalarGridSpec(
            num_scalar_prefetch=0,
            grid=(n, nb),
            in_specs=[pl.BlockSpec((1, cin, tp), lambda i, b: (i, 0, b)),
                      pl.BlockSpec((fc, cin), lambda i, b: (0, 0)),
                      pl.BlockSpec((1, fc, 1), lambda i, b: (i, 0, 0)),
                      pl.BlockSpec((1, fc, 1), lambda i, b: (i, 0, 0))],
            out_specs=pl.BlockSpec((1, fc, tp), lambda i, b: (i, 0, b)),
        ),
        compiler_params=pltpu.CompilerParams(
            dimension_semantics=("parallel", "parallel")),
    )(x3d, w_stack, scale_t, shift_t)


# ----------------------------- forward (glue) -----------------------------

def transpose_conv_block_forward(x_nchw, weight, eps=1e-5):
    """x: (N, Cin, H, W); weight: (Cin, Cout, 2, 2) (PyTorch ConvTranspose2d layout)."""
    n, cin, h, w = x_nchw.shape
    cout = weight.shape[1]
    hw = h * w
    fc = 4 * cout
    tp = _pick_tile(hw)

    x3d = x_nchw.reshape(n, cin, hw).astype(jnp.float32)
    # w_stack[(2*dy+dx)*Cout + c, cin] = weight[cin, c, dy, dx]
    w_stack = jnp.transpose(weight, (2, 3, 1, 0)).reshape(fc, cin).astype(jnp.float32)

    # Pass 1: partial sums / sums-of-squares of the conv-transpose output.
    stats = convt_stats(x3d, w_stack, tp)                       # (nb, N, 4*Cout, 2)
    tot = stats.sum(axis=0).reshape(n, 4, cout, 2).sum(axis=1)  # (N, Cout, 2), tiny
    count = 4.0 * hw
    mean = tot[..., 0] / count
    var = tot[..., 1] / count - mean * mean                     # biased variance (InstanceNorm)
    scale = jax.lax.rsqrt(var + eps)                            # (N, Cout)
    shift = -mean * scale
    scale_t = jnp.tile(scale, (1, 4))[:, :, None]               # (N, 4*Cout, 1)
    shift_t = jnp.tile(shift, (1, 4))[:, :, None]

    # Pass 2: conv-transpose + fused InstanceNorm + LeakyReLU.
    z = convt_norm_act(x3d, w_stack, scale_t, shift_t, tp)      # (N, 4*Cout, H*W)

    # Interleave the 2x2 taps back into the upsampled NCHW image (pure layout permutation).
    out = z.reshape(n, 2, 2, cout, h, w)
    out = jnp.transpose(out, (0, 3, 4, 1, 5, 2)).reshape(n, cout, 2 * h, 2 * w)
    return out


# ----------------------------- pure-JAX reference -----------------------------

def transpose_conv_block_reference(x, weight, eps=1e-5):
    n, cin, h, w = x.shape
    cout = weight.shape[1]
    y = jnp.einsum("nchw,cokl->nohkwl", x, weight,
                   precision=jax.lax.Precision.HIGHEST)
    y = y.reshape(n, cout, 2 * h, 2 * w)
    mu = jnp.mean(y, axis=(2, 3), keepdims=True)
    var = jnp.mean((y - mu) ** 2, axis=(2, 3), keepdims=True)
    yn = (y - mu) / jnp.sqrt(var + eps)
    return jnp.where(yn >= 0.0, yn, 0.2 * yn)


# ----------------------------- main -----------------------------

if __name__ == "__main__":
    B, in_chans, out_chans, H, W = 2, 8, 4, 16, 16

    key = jax.random.PRNGKey(0)
    k_x, k_w = jax.random.split(key)
    x = jax.random.normal(k_x, (B, in_chans, H, W), jnp.float32)
    # PyTorch ConvTranspose2d weight layout: (in_chans, out_chans, kH, kW), bias=False
    weight = jax.random.normal(k_w, (in_chans, out_chans, 2, 2), jnp.float32) * 0.3

    out = jax.jit(transpose_conv_block_forward)(x, weight)
    out = jax.block_until_ready(out)

    ref = transpose_conv_block_reference(x, weight)
    err = float(jnp.max(jnp.abs(out - ref)))
    assert out.shape == (B, out_chans, 2 * H, 2 * W), out.shape
    assert err < 5e-2, f"max abs err {err}"
    print("KERNEL_OK")
</pallas_src>

<mosaic_0001>
module attributes {stable_mosaic.version = 11 : i64} {
  func.func @_convt_stats_kernel(%arg0: i32, %arg1: i32, %arg2: memref<1x8x256xf32, #tpu.memory_space<vmem>>, %arg3: memref<16x8xf32, #tpu.memory_space<vmem>>, %arg4: memref<1x1x16x2xf32, #tpu.memory_space<vmem>>) attributes {dimension_semantics = [#tpu.dimension_semantics<parallel>, #tpu.dimension_semantics<parallel>], iteration_bounds = array<i64: 2, 1>, scalar_prefetch = 0 : i64, scratch_operands = 0 : i64, tpu.core_type = #tpu.core_type<tc>, window_params = [{transform_indices = @transform_0, window_bounds = array<i64: 1, 8, 256>}, {pipeline_mode = #tpu.pipeline_mode<synchronous>, transform_indices = @transform_1, window_bounds = array<i64: 16, 8>}, {transform_indices = @transform_2, window_bounds = array<i64: 1, 1, 16, 2>}]} {
    %c0 = arith.constant 0 : index
    %c0_0 = arith.constant 0 : index
    %0 = vector.load %arg3[%c0, %c0_0] : memref<16x8xf32, #tpu.memory_space<vmem>>, vector<16x8xf32>
    %c0_1 = arith.constant 0 : index
    %c0_2 = arith.constant 0 : index
    %c0_3 = arith.constant 0 : index
    %1 = vector.load %arg2[%c0_1, %c0_2, %c0_3] : memref<1x8x256xf32, #tpu.memory_space<vmem>>, vector<1x8x256xf32>
    %2 = vector.shape_cast %1 : vector<1x8x256xf32> to vector<8x256xf32>
    %cst = arith.constant dense<0.000000e+00> : vector<16x256xf32>
    %3 = tpu.matmul %0, %2, %cst {dimension_numbers = #tpu.dot_dimension_numbers<[1], [0], [0], [1], [0, 0, 1, 1], [], []>} : vector<16x8xf32>, vector<8x256xf32>, vector<16x256xf32> -> vector<16x256xf32>
    %cst_4 = arith.constant dense<0.000000e+00> : vector<16xf32>
    %4 = vector.multi_reduction <add>, %3, %cst_4 [1] : vector<16x256xf32> to vector<16xf32>
    %5 = vector.shape_cast %4 : vector<16xf32> to vector<16x1xf32>
    %6 = arith.mulf %3, %3 : vector<16x256xf32>
    %cst_5 = arith.constant dense<0.000000e+00> : vector<16xf32>
    %7 = vector.multi_reduction <add>, %6, %cst_5 [1] : vector<16x256xf32> to vector<16xf32>
    %8 = vector.shape_cast %7 : vector<16xf32> to vector<16x1xf32>
    %9 = tpu.concatenate %5, %8 in 1 : vector<16x1xf32>, vector<16x1xf32> -> vector<16x2xf32>
    %c0_6 = arith.constant 0 : index
    %c0_7 = arith.constant 0 : index
    %c0_8 = arith.constant 0 : index
    %c0_9 = arith.constant 0 : index
    %10 = vector.load %arg4[%c0_6, %c0_7, %c0_8, %c0_9] : memref<1x1x16x2xf32, #tpu.memory_space<vmem>>, vector<1x1x16x2xf32>
    %11 = vector.shape_cast %10 : vector<1x1x16x2xf32> to vector<16x2xf32>
    %12 = vector.shape_cast %9 : vector<16x2xf32> to vector<1x1x16x2xf32>
    tpu.vector_store %arg4[%c0_6, %c0_7, %c0_8, %c0_9], %12 {strides = array<i32>} : memref<1x1x16x2xf32, #tpu.memory_space<vmem>>, vector<1x1x16x2xf32>,
    return
  }
  func.func @transform_0(%arg0: i32, %arg1: i32) -> (i32, i32, i32) {
    %c0_i32 = arith.constant 0 : i32
    %c0_i32_0 = arith.constant 0 : i32
    return %arg0, %c0_i32, %arg1 : i32, i32, i32
  }
  func.func @transform_1(%arg0: i32, %arg1: i32) -> (i32, i32) {
    %c0_i32 = arith.constant 0 : i32
    %c0_i32_0 = arith.constant 0 : i32
    %c0_i32_1 = arith.constant 0 : i32
    return %c0_i32, %c0_i32_0 : i32, i32
  }
  func.func @transform_2(%arg0: i32, %arg1: i32) -> (i32, i32, i32, i32) {
    %c0_i32 = arith.constant 0 : i32
    %c0_i32_0 = arith.constant 0 : i32
    %c0_i32_1 = arith.constant 0 : i32
    return %arg1, %arg0, %c0_i32, %c0_i32_0 : i32, i32, i32, i32
  }
}

module attributes {stable_mosaic.version = 11 : i64} {
  func.func @_convt_norm_act_kernel(%arg0: i32, %arg1: i32, %arg2: memref<1x8x256xf32, #tpu.memory_space<vmem>>, %arg3: memref<16x8xf32, #tpu.memory_space<vmem>>, %arg4: memref<1x16x1xf32, #tpu.memory_space<vmem>>, %arg5: memref<1x16x1xf32, #tpu.memory_space<vmem>>, %arg6: memref<1x16x256xf32, #tpu.memory_space<vmem>>) attributes {dimension_semantics = [#tpu.dimension_semantics<parallel>, #tpu.dimension_semantics<parallel>], iteration_bounds = array<i64: 2, 1>, scalar_prefetch = 0 : i64, scratch_operands = 0 : i64, tpu.core_type = #tpu.core_type<tc>, window_params = [{transform_indices = @transform_0, window_bounds = array<i64: 1, 8, 256>}, {pipeline_mode = #tpu.pipeline_mode<synchronous>, transform_indices = @transform_1, window_bounds = array<i64: 16, 8>}, {transform_indices = @transform_2, window_bounds = array<i64: 1, 16, 1>}, {transform_indices = @transform_3, window_bounds = array<i64: 1, 16, 1>}, {transform_indices = @transform_4, window_bounds = array<i64: 1, 16, 256>}]} {
    %c0 = arith.constant 0 : index
    %c0_0 = arith.constant 0 : index
    %0 = vector.load %arg3[%c0, %c0_0] : memref<16x8xf32, #tpu.memory_space<vmem>>, vector<16x8xf32>
    %c0_1 = arith.constant 0 : index
    %c0_2 = arith.constant 0 : index
    %c0_3 = arith.constant 0 : index
    %1 = vector.load %arg2[%c0_1, %c0_2, %c0_3] : memref<1x8x256xf32, #tpu.memory_space<vmem>>, vector<1x8x256xf32>
    %2 = vector.shape_cast %1 : vector<1x8x256xf32> to vector<8x256xf32>
    %cst = arith.constant dense<0.000000e+00> : vector<16x256xf32>
    %3 = tpu.matmul %0, %2, %cst {dimension_numbers = #tpu.dot_dimension_numbers<[1], [0], [0], [1], [0, 0, 1, 1], [], []>} : vector<16x8xf32>, vector<8x256xf32>, vector<16x256xf32> -> vector<16x256xf32>
    %c0_4 = arith.constant 0 : index
    %c0_5 = arith.constant 0 : index
    %c0_6 = arith.constant 0 : index
    %4 = vector.load %arg4[%c0_4, %c0_5, %c0_6] : memref<1x16x1xf32, #tpu.memory_space<vmem>>, vector<1x16x1xf32>
    %5 = vector.shape_cast %4 : vector<1x16x1xf32> to vector<16x1xf32>
    %6 = vector.broadcast %5 : vector<16x1xf32> to vector<16x256xf32>
    %7 = arith.mulf %3, %6 : vector<16x256xf32>
    %c0_7 = arith.constant 0 : index
    %c0_8 = arith.constant 0 : index
    %c0_9 = arith.constant 0 : index
    %8 = vector.load %arg5[%c0_7, %c0_8, %c0_9] : memref<1x16x1xf32, #tpu.memory_space<vmem>>, vector<1x16x1xf32>
    %9 = vector.shape_cast %8 : vector<1x16x1xf32> to vector<16x1xf32>
    %10 = vector.broadcast %9 : vector<16x1xf32> to vector<16x256xf32>
    %11 = arith.addf %7, %10 : vector<16x256xf32>
    %cst_10 = arith.constant 0.000000e+00 : f32
    %12 = vector.broadcast %cst_10 : f32 to vector<16x256xf32>
    %13 = arith.cmpf oge, %11, %12 : vector<16x256xf32>
    %cst_11 = arith.constant 2.000000e-01 : f32
    %14 = vector.broadcast %cst_11 : f32 to vector<16x256xf32>
    %15 = arith.mulf %14, %11 : vector<16x256xf32>
    %16 = arith.select %13, %11, %15 : vector<16x256xi1>, vector<16x256xf32>
    %c0_12 = arith.constant 0 : index
    %c0_13 = arith.constant 0 : index
    %c0_14 = arith.constant 0 : index
    %17 = vector.load %arg6[%c0_12, %c0_13, %c0_14] : memref<1x16x256xf32, #tpu.memory_space<vmem>>, vector<1x16x256xf32>
    %18 = vector.shape_cast %17 : vector<1x16x256xf32> to vector<16x256xf32>
    %19 = vector.shape_cast %16 : vector<16x256xf32> to vector<1x16x256xf32>
    tpu.vector_store %arg6[%c0_12, %c0_13, %c0_14], %19 {strides = array<i32>} : memref<1x16x256xf32, #tpu.memory_space<vmem>>, vector<1x16x256xf32>,
    return
  }
  func.func @transform_0(%arg0: i32, %arg1: i32) -> (i32, i32, i32) {
    %c0_i32 = arith.constant 0 : i32
    %c0_i32_0 = arith.constant 0 : i32
    return %arg0, %c0_i32, %arg1 : i32, i32, i32
  }
  func.func @transform_1(%arg0: i32, %arg1: i32) -> (i32, i32) {
    %c0_i32 = arith.constant 0 : i32
    %c0_i32_0 = arith.constant 0 : i32
    %c0_i32_1 = arith.constant 0 : i32
    return %c0_i32, %c0_i32_0 : i32, i32
  }
  func.func @transform_2(%arg0: i32, %arg1: i32) -> (i32, i32, i32) {
    %c0_i32 = arith.constant 0 : i32
    %c0_i32_0 = arith.constant 0 : i32
    %c0_i32_1 = arith.constant 0 : i32
    return %arg0, %c0_i32, %c0_i32_0 : i32, i32, i32
  }
  func.func @transform_3(%arg0: i32, %arg1: i32) -> (i32, i32, i32) {
    %c0_i32 = arith.constant 0 : i32
    %c0_i32_0 = arith.constant 0 : i32
    %c0_i32_1 = arith.constant 0 : i32
    return %arg0, %c0_i32, %c0_i32_0 : i32, i32, i32
  }
  func.func @transform_4(%arg0: i32, %arg1: i32) -> (i32, i32, i32) {
    %c0_i32 = arith.constant 0 : i32
    %c0_i32_0 = arith.constant 0 : i32
    return %arg0, %c0_i32, %arg1 : i32, i32, i32
  }
}

</mosaic_0001>

<llo_original>
// kernel: mul.12
$region0: #{mul.12}
  #allocation0 [shape = 's32[1]{0}', space=sflag, size = 0x4, scoped, tag = 'scoped memory for mul.12']
  %s0 = inlined_call_operand.vmem [shape: f32[2,4], index: 0, kind: input, shape index: {}]
  %s1 = inlined_call_operand.vmem [shape: f32[2,4], index: 1, kind: input, shape index: {}]
  %s2 = inlined_call_operand.vmem [shape: f32[2,4], index: 2, kind: output, shape index: {}]
  %v3 = vld [vmem:[%s0] sm:$0x3]
  %v4 = vld [vmem:[%s1] sm:$0x3]
  %5 = xla_tuple %v3, %v4
  %6 = xla_tuple %5
  %v7 = vmul.f32 %v3, %v4
  %8 = xla_tuple %v7
  %9 = vst [vmem:[%s2] sm:$0x3] %v7

</llo_original>
